<compile_context>
chip_gen: v7x
topology: tpu7x:2x2x1
jax: 0.10.0
libtpu: 0.0.40
codegen_flags: <defaults>
</compile_context>

<pallas_src>
import math

import jax
import jax.numpy as jnp
from jax.experimental import pallas as pl
from jax.experimental.pallas import tpu as pltpu


def _copy_kernel(x_ref, o_ref):
    # Pure element movement: one (B, TF) tile in, same tile out.
    o_ref[...] = x_ref[...]


def _resolve_shape(shape, total):
    """Resolve a single -1 entry like torch.view does."""
    shape = tuple(int(s) for s in shape)
    if -1 in shape:
        known = 1
        for s in shape:
            if s != -1:
                known *= s
        missing = total // known
        shape = tuple(missing if s == -1 else s for s in shape)
    assert math.prod(shape) == total, "Reshape: element count mismatch"
    return shape


def _pick_feature_tile(B, F, itemsize, vmem_budget_bytes=8 << 20):
    """Largest multiple-of-128 divisor of F whose double-buffered in+out tiles
    (~4 * B * TF * itemsize bytes) stay within a conservative VMEM budget.
    Falls back to the full extent F (always legal as a block dim)."""
    if F % 128 != 0:
        return F
    max_elems = max(128, vmem_budget_bytes // (4 * max(B, 1) * itemsize))
    start = min(F, (max_elems // 128) * 128)
    for t in range(start, 0, -128):
        if F % t == 0:
            return t
    return F


def reshape_forward(x, shape):
    """Pallas equivalent of Reshape(shape).forward(x) == x.view(len(x), *shape)."""
    B = x.shape[0]
    F = math.prod(x.shape[1:])
    out_shape = _resolve_shape(shape, F)

    # Wrapper-side flatten: metadata-only, presents a lane-dense (B, F) slab.
    x2 = x.reshape(B, F)

    TF = _pick_feature_tile(B, F, jnp.dtype(x.dtype).itemsize)
    grid = (F // TF,)

    out2 = pl.pallas_call(
        _copy_kernel,
        out_shape=jax.ShapeDtypeStruct((B, F), x.dtype),
        grid_spec=pl.GridSpec(
            grid=grid,
            # Batch dim uses the full extent (always a legal block dim);
            # feature dim is tiled in lane-dense multiples of 128.
            in_specs=[pl.BlockSpec((B, TF), lambda j: (0, j))],
            out_specs=pl.BlockSpec((B, TF), lambda j: (0, j)),
        ),
        compiler_params=pltpu.CompilerParams(
            # Independent tiles -> parallel: lets v7x shard across its 2 TCs;
            # neutral on v5e/v6e.
            dimension_semantics=("parallel",),
        ),
    )(x2)

    # Wrapper-side metadata reshape to the requested (B, *shape).
    return out2.reshape(B, *out_shape)


if __name__ == "__main__":
    key = jax.random.PRNGKey(0)

    # Case 1: conv-style activations (B, C, H, W) -> (B, 16, 64), f32.
    B, C, H, W = 2, 4, 16, 16
    x = jax.random.normal(key, (B, C, H, W), dtype=jnp.float32)
    target_shape = (16, 64)
    out = jax.block_until_ready(reshape_forward(x, target_shape))
    ref = x.reshape(B, *target_shape)
    assert out.shape == (B, 16, 64) and out.dtype == x.dtype
    assert jnp.array_equal(out, ref)

    # Case 2: bf16 activations with a -1 in the target shape (torch.view semantics).
    x2 = jax.random.normal(jax.random.PRNGKey(1), (2, 8, 32), dtype=jnp.bfloat16)
    out2 = jax.block_until_ready(reshape_forward(x2, (-1, 128)))
    ref2 = x2.reshape(2, 2, 128)
    assert out2.shape == (2, 2, 128) and out2.dtype == jnp.bfloat16
    assert jnp.array_equal(out2, ref2)

    # Case 3: feature count not a multiple of 128 -> full-extent block fallback.
    x3 = jax.random.normal(jax.random.PRNGKey(2), (3, 5, 6), dtype=jnp.float32)
    out3 = jax.block_until_ready(reshape_forward(x3, (30,)))
    assert jnp.array_equal(out3, x3.reshape(3, 30))

    print("KERNEL_OK")
</pallas_src>

<mosaic_0001>
module attributes {stable_mosaic.version = 11 : i64} {
  func.func @_copy_kernel(%arg0: i32, %arg1: memref<2x1024xf32, #tpu.memory_space<vmem>>, %arg2: memref<2x1024xf32, #tpu.memory_space<vmem>>) attributes {dimension_semantics = [#tpu.dimension_semantics<parallel>], iteration_bounds = array<i64: 1>, scalar_prefetch = 0 : i64, scratch_operands = 0 : i64, tpu.core_type = #tpu.core_type<tc>, window_params = [{transform_indices = @transform_0, window_bounds = array<i64: 2, 1024>}, {transform_indices = @transform_1, window_bounds = array<i64: 2, 1024>}]} {
    %c0 = arith.constant 0 : index
    %c0_0 = arith.constant 0 : index
    %0 = vector.load %arg1[%c0, %c0_0] : memref<2x1024xf32, #tpu.memory_space<vmem>>, vector<2x1024xf32>
    %c0_1 = arith.constant 0 : index
    %c0_2 = arith.constant 0 : index
    %1 = vector.load %arg2[%c0_1, %c0_2] : memref<2x1024xf32, #tpu.memory_space<vmem>>, vector<2x1024xf32>
    tpu.vector_store %arg2[%c0_1, %c0_2], %0 {strides = array<i32>} : memref<2x1024xf32, #tpu.memory_space<vmem>>, vector<2x1024xf32>,
    return
  }
  func.func @transform_0(%arg0: i32) -> (i32, i32) {
    %c0_i32 = arith.constant 0 : i32
    %c0_i32_0 = arith.constant 0 : i32
    return %c0_i32, %arg0 : i32, i32
  }
  func.func @transform_1(%arg0: i32) -> (i32, i32) {
    %c0_i32 = arith.constant 0 : i32
    %c0_i32_0 = arith.constant 0 : i32
    return %c0_i32, %arg0 : i32, i32
  }
}

</mosaic_0001>

<llo_original>
// kernel: tpu_custom_call.1
$region0: #{tpu_custom_call.1}
  #allocation0 [shape = 'u32[]', space=smem, size = 0x4, offset = 0x4, fixed_abs, tag = 'smem constant byte address 0x4 - core index']
  #allocation1 [shape = 'u32[144,128]{1,0:T(1,128)}', space=vmem, size = 0x12000, scoped, tag = 'internal scratch']
  %s0 = inlined_call_operand.hbm [shape: f32[2,1024], index: 0, kind: input, shape index: {}]
  %s1 = inlined_call_operand.hbm [shape: f32[2,1024], index: 1, kind: output, shape index: {}]
  %s2 = sld [smem:[#allocation0]]
  $region18: #{tpu_custom_call.1} parent=0
    _
  %s4 = ssub.s32 1, %s2
  %s5 = scalar_select 0, %s4, %s2
  $region1: #{tpu_custom_call.1} parent=0
    #allocation2 [shape = 'u8[8192]{0}', space=vmem, size = 0x2000, scoped, tag = 'input window, operand 0, single buffered']
    #allocation3 [shape = 's32[1]{0}', space=sflag, size = 0x4, scoped, tag = 'scoped memory for tpu_custom_call.1']
    #allocation4 [shape = 's32[1]{0}', space=sflag, size = 0x4, scoped, tag = 'scoped memory for tpu_custom_call.1']
    #allocation5 [shape = 'u8[8192]{0}', space=vmem, size = 0x2000, scoped, tag = 'output window, operand 0, single buffered']
    %6 = vsyncpa [#allocation3], 0
    %7 = vsyncpa [#allocation4], 0
    // Predicated region
    $region2: #{tpu_custom_call.1} parent=1 // pred_check
      _
    $region3: #{tpu_custom_call.1} parent=1 // pred_check_branch
      %9 = sbr.rel (0) target = $region5
    $region4: #{tpu_custom_call.1} parent=1 // pred_region
      %s11 = ssub.s32 256, 256
      %12 = vsyncadd [#allocation3], %s11
      %s14 = sshll.u32 [#allocation2], 4
      %s15 = int_to_ptr.vmem [resolvable:$true] %s14
      %17 = dma.hbm_to_vmem [thread:$0]  %s0, 256, %s15, [#allocation3]
    $region5: #{tpu_custom_call.1} parent=1 // pred_fallthru
      _
    // Predicated region
    $region6: #{tpu_custom_call.1} parent=1 // pred_check
      _
    $region7: #{tpu_custom_call.1} parent=1 // pred_check_branch
      %19 = sbr.rel (0) target = $region9
    $region8: #{tpu_custom_call.1} parent=1 // pred_region
      %20 = dma.done [#allocation3], 256
    $region9: #{tpu_custom_call.1} parent=1 // pred_fallthru
      _
    %v21 = vld [vmem:[#allocation2] sm:$0xff]
    %v22 = vld [vmem:[#allocation2 + $0x8] sm:$0xff]
    %23 = vst [vmem:[#allocation5] sm:$0xff] %v21
    %24 = vst [vmem:[#allocation5 + $0x8] sm:$0xff] %v22
    // Predicated region
    $region10: #{tpu_custom_call.1} parent=1 // pred_check
      _
    $region11: #{tpu_custom_call.1} parent=1 // pred_check_branch
      %26 = sbr.rel (0) target = $region13
    $region12: #{tpu_custom_call.1} parent=1 // pred_region
      %s28 = ssub.s32 256, 256
      %29 = vsyncadd [#allocation4], %s28
      %s31 = sshll.u32 [#allocation5], 4
      %s32 = int_to_ptr.vmem [resolvable:$true] %s31
      %34 = dma.vmem_to_hbm [thread:$0]  %s32, 256, %s1, [#allocation4]
    $region13: #{tpu_custom_call.1} parent=1 // pred_fallthru
      _
    // Predicated region
    $region14: #{tpu_custom_call.1} parent=1 // pred_check
      _
    $region15: #{tpu_custom_call.1} parent=1 // pred_check_branch
      %36 = sbr.rel (0) target = $region17
    $region16: #{tpu_custom_call.1} parent=1 // pred_region
      %37 = dma.done [#allocation4], 256
    $region17: #{tpu_custom_call.1} parent=1 // pred_fallthru
      _
    %38 = vsyncpa [#allocation3], 1
    %39 = vsyncpa [#allocation4], 1

</llo_original>
